<compile_context>
chip_gen: v7x
topology: tpu7x:2x2x1
jax: 0.10.0
libtpu: 0.0.40
codegen_flags: <defaults>
</compile_context>

<pallas_src>
import functools

import jax
import jax.numpy as jnp
from jax.experimental import pallas as pl
from jax.experimental.pallas import tpu as pltpu


# ----------------------------------------------------------------------------
# pltpu.roll direction probe (tiny one-off kernel, cached) so the conv2 tap
# shifts are robust to the rotate sign convention.
# ----------------------------------------------------------------------------
@functools.cache
def _roll_matches_jnp():
    def k(x_ref, o_ref):
        o_ref[...] = pltpu.roll(x_ref[...], 1, axis=1)

    x = jnp.arange(128, dtype=jnp.int32).reshape(1, 128)
    y = pl.pallas_call(k, out_shape=jax.ShapeDtypeStruct((1, 128), jnp.int32))(x)
    return int(y[0, 0]) == 127        # jnp.roll semantics: out[j] = in[j - shift]


def _lane_fetch(v, off, n, jnp_like):
    """Returns w with w[..., j] = v[..., (j + off) % n] (off: static Python int)."""
    shift = (-off) % n if jnp_like else off % n
    if shift == 0:
        return v
    return pltpu.roll(v, shift, axis=1)


# ----------------------------------------------------------------------------
# Fused conv1(3x3,pad1)+pool(2,2) + conv2(3x3,pad1)+pool(2,2) for a batch block
# ----------------------------------------------------------------------------
def _conv_block_kernel(block_b, roll_jnp,
                       cols1_ref, w1_ref, b1_ref, w2_ref, b2_ref, o_ref):
    # cols1_ref: (27, M0)  bf16  conv1 im2col, lanes (x%2, y%2, x1%2, y1%2, b, y2, x2)
    # w1_ref   : (32, 27)  bf16   col = (ky*3+kx)*3 + cin
    # w2_ref   : (64, 288) bf16   col = (ky*3+kx)*32 + c1
    # b1/b2    : (C, 1)    f32
    # o_ref    : (64, B*64) bf16  lanes (b, y2, x2)  (NCHW-flatten friendly)
    B = block_b
    QB = B * 64               # one (pc, pr) quadrant of act1 lanes
    M1 = 4 * QB               # act1 lanes  = B*16*16
    M0 = 16 * QB              # cols1 lanes = B*32*32

    # ---- conv1: one K=27 MXU matmul, pool via two half-splits, bias + ReLU ----
    z1 = jnp.dot(w1_ref[...], cols1_ref[...], preferred_element_type=jnp.float32)
    m = jnp.maximum(z1[:, : M0 // 2], z1[:, M0 // 2:])     # pool over x parity
    m = jnp.maximum(m[:, : M0 // 4], m[:, M0 // 4:])       # pool over y parity
    act1 = jnp.maximum(m + b1_ref[...], 0.0).astype(jnp.bfloat16)   # (32, M1)

    # act1 lane layout: L = pc*2QB + pr*QB + b*64 + R*8 + C  with spatial
    # coords (r, c) = (2R+pr, 2C+pc), r, c in [0, 16).
    lane = jax.lax.broadcasted_iota(jnp.int32, (1, M1), 1)
    pc = lane // (2 * QB)
    pr = (lane // QB) % 2
    q = lane % QB
    c = 2 * (q % 8) + pc
    r = 2 * ((q // 8) % 8) + pr
    pc0 = pc == 0
    pr0 = pr == 0

    def fetch(v, off):
        return _lane_fetch(v, off, M1, roll_jnp)

    # ---- conv2 im2col in-kernel: 9 parity-aware shifted copies of act1 ----
    taps = []
    for dy in (-1, 0, 1):
        for dx in (-1, 0, 1):
            v = act1
            if dx == 1:       # value at (r, c+1)
                v = jnp.where(pc0, fetch(v, 2 * QB), fetch(v, -2 * QB + 1))
            elif dx == -1:    # value at (r, c-1)
                v = jnp.where(pc0, fetch(v, 2 * QB - 1), fetch(v, -2 * QB))
            if dy == 1:       # value at (r+1, .)
                v = jnp.where(pr0, fetch(v, QB), fetch(v, -QB + 8))
            elif dy == -1:    # value at (r-1, .)
                v = jnp.where(pr0, fetch(v, QB - 8), fetch(v, -QB))
            if dy == 0 and dx == 0:
                taps.append(v)
                continue
            valid = ((r + dy >= 0) & (r + dy < 16) &
                     (c + dx >= 0) & (c + dx < 16))
            taps.append(jnp.where(valid, v, 0.0))
    cols2 = jnp.concatenate(taps, axis=0)                  # (288, M1) bf16

    # ---- conv2: one K=288 MXU matmul, pool via two half-splits, bias + ReLU ----
    z2 = jnp.dot(w2_ref[...], cols2, preferred_element_type=jnp.float32)  # (64, M1)
    m2 = jnp.maximum(z2[:, : M1 // 2], z2[:, M1 // 2:])    # pool over x parity (pc)
    m2 = jnp.maximum(m2[:, : M1 // 4], m2[:, M1 // 4:])    # pool over y parity (pr)
    o_ref[...] = jnp.maximum(m2 + b2_ref[...], 0.0).astype(o_ref.dtype)


def _conv1_cols(x_nhwc, block_b):
    """(Np,32,32,3) -> (Nb, 27, block_b*1024) with double-parity lane ordering.

    Lane order (outer->inner): (x%2, y%2, x1%2, y1%2, b, y2, x2) where
    (y1, x1) = (y//2, x//2) and (y2, x2) = (y//4, x//4).  This makes both 2x2
    max-pools two lane half-splits and the final output NCHW-flatten ready.
    """
    Np, H, W, Cin = x_nhwc.shape
    Nb = Np // block_b
    xp = jnp.pad(x_nhwc, ((0, 0), (1, 1), (1, 1), (0, 0)))
    taps = [xp[:, ky:ky + H, kx:kx + W, :] for ky in range(3) for kx in range(3)]
    a = jnp.stack(taps, axis=3).reshape(Np, H, W, 9 * Cin)
    # y = 4*Y + 2*pr + yp0 ; x = 4*X + 2*pc + xp0
    a = a.reshape(Nb, block_b, H // 4, 2, 2, W // 4, 2, 2, 9 * Cin)
    #                  b       Y    pr yp0  X     pc xp0   K
    a = jnp.transpose(a, (0, 8, 7, 4, 6, 3, 1, 2, 5))   # (Nb,K,xp0,yp0,pc,pr,b,Y,X)
    return a.reshape(Nb, 9 * Cin, block_b * H * W)


def conv_stack(x_nhwc, w1_hwio, b1, w2_hwio, b2, *, block_b):
    Np, H, W, Cin = x_nhwc.shape
    assert H == 32 and W == 32 and Cin == 3, "CIFARNet expects 3x32x32 inputs"
    assert Np % block_b == 0 and block_b % 2 == 0
    C1 = w1_hwio.shape[-1]
    C2 = w2_hwio.shape[-1]
    Nb = Np // block_b
    M0 = block_b * H * W                 # conv1 im2col lanes
    Mo = block_b * (H // 4) * (W // 4)   # fused-output lanes (multiple of 128)

    cols1 = _conv1_cols(x_nhwc.astype(jnp.bfloat16), block_b)        # (Nb, 27, M0)
    w1 = jnp.transpose(w1_hwio, (3, 0, 1, 2)).reshape(C1, 9 * Cin).astype(jnp.bfloat16)
    w2 = jnp.transpose(w2_hwio, (3, 0, 1, 2)).reshape(C2, 9 * C1).astype(jnp.bfloat16)
    b1r = b1.reshape(C1, 1).astype(jnp.float32)
    b2r = b2.reshape(C2, 1).astype(jnp.float32)

    kern = functools.partial(_conv_block_kernel, block_b, _roll_matches_jnp())
    out = pl.pallas_call(
        kern,
        out_shape=jax.ShapeDtypeStruct((Nb, C2, Mo), jnp.bfloat16),
        grid_spec=pltpu.PrefetchScalarGridSpec(
            num_scalar_prefetch=0,
            grid=(Nb,),
            in_specs=[
                pl.BlockSpec((None, 9 * Cin, M0), lambda n: (n, 0, 0)),
                pl.BlockSpec((C1, 9 * Cin), lambda n: (0, 0)),
                pl.BlockSpec((C1, 1), lambda n: (0, 0)),
                pl.BlockSpec((C2, 9 * C1), lambda n: (0, 0)),
                pl.BlockSpec((C2, 1), lambda n: (0, 0)),
            ],
            out_specs=pl.BlockSpec((None, C2, Mo), lambda n: (n, 0, 0)),
        ),
        compiler_params=pltpu.CompilerParams(
            dimension_semantics=("parallel",),
            vmem_limit_bytes=32 * 1024 * 1024,    # v5e's scoped default is 16 MiB
        ),
    )(cols1, w1, b1r, w2, b2r)
    return out                                   # (Nb, 64, block_b*64), lanes (b,y2,x2)


# ----------------------------------------------------------------------------
# FC head: relu(x @ W1 + b1) @ W2 + b2  (weights fully VMEM-resident, no K grid)
# ----------------------------------------------------------------------------
def _fc_kernel(x_ref, w1_ref, b1_ref, w2_ref, b2_ref, o_ref):
    h = jnp.dot(x_ref[...], w1_ref[...], preferred_element_type=jnp.float32)
    h = jnp.maximum(h + b1_ref[...], 0.0).astype(jnp.bfloat16)
    o_ref[...] = (
        jnp.dot(h, w2_ref[...], preferred_element_type=jnp.float32) + b2_ref[...]
    )


def fc_head(x_flat, w1, b1, w2, b2):
    N, D = x_flat.shape
    H1 = w1.shape[1]
    C = w2.shape[1]
    H1p = (H1 + 127) // 128 * 128            # 500 -> 512: lane-dense hidden layer
    Cp = max(128, (C + 127) // 128 * 128)    # 10  -> 128: unmasked logits store
    tm = 128 if N > 128 else (N + 7) // 8 * 8
    Mp = (N + tm - 1) // tm * tm
    nm = Mp // tm

    xb = jnp.zeros((Mp, D), jnp.bfloat16).at[:N].set(x_flat.astype(jnp.bfloat16))
    w1p = jnp.zeros((D, H1p), jnp.bfloat16).at[:, :H1].set(w1.astype(jnp.bfloat16))
    b1p = jnp.zeros((1, H1p), jnp.float32).at[:, :H1].set(b1.astype(jnp.float32))
    w2p = jnp.zeros((H1p, Cp), jnp.bfloat16).at[:H1, :C].set(w2.astype(jnp.bfloat16))
    b2p = jnp.zeros((1, Cp), jnp.float32).at[:, :C].set(b2.astype(jnp.float32))

    out = pl.pallas_call(
        _fc_kernel,
        out_shape=jax.ShapeDtypeStruct((Mp, Cp), jnp.float32),
        grid_spec=pltpu.PrefetchScalarGridSpec(
            num_scalar_prefetch=0,
            grid=(nm,),                          # batch-block axis only (parallel)
            in_specs=[
                pl.BlockSpec((tm, D), lambda m: (m, 0)),
                pl.BlockSpec((D, H1p), lambda m: (0, 0)),
                pl.BlockSpec((1, H1p), lambda m: (0, 0)),
                pl.BlockSpec((H1p, Cp), lambda m: (0, 0)),
                pl.BlockSpec((1, Cp), lambda m: (0, 0)),
            ],
            out_specs=pl.BlockSpec((tm, Cp), lambda m: (m, 0)),
        ),
        compiler_params=pltpu.CompilerParams(
            dimension_semantics=("parallel",),
            vmem_limit_bytes=32 * 1024 * 1024,
        ),
    )(xb, w1p, b1p, w2p, b2p)
    return out[:N, :C]


# ----------------------------------------------------------------------------
# Full forward pass (mirrors CIFARNet.forward)
# ----------------------------------------------------------------------------
def _pick_block_b(n):
    # Prefer >=2 grid steps (v7x megacore) while keeping blocks big enough to
    # amortize the ~0.35us/step pipeline cost; cap at 16 for v5e VMEM headroom.
    if n >= 32:
        return 16
    return min(16, max(2, ((n + 3) // 4) * 2))


def cifarnet_forward(x_nchw, params):
    N, _, H, W = x_nchw.shape
    block_b = _pick_block_b(N)
    Np = (N + block_b - 1) // block_b * block_b
    Nb = Np // block_b

    x = jnp.transpose(x_nchw, (0, 2, 3, 1))                 # NCHW -> NHWC
    if Np != N:
        x = jnp.pad(x, ((0, Np - N), (0, 0), (0, 0), (0, 0)))

    # fused conv1 + pool + conv2 + pool (one pallas_call over batch blocks)
    y = conv_stack(x, params["conv1_w"], params["conv1_b"],
                   params["conv2_w"], params["conv2_b"], block_b=block_b)

    C2 = params["conv2_w"].shape[-1]
    S2 = (H // 4) * (W // 4)                                # 8*8 = 64
    # (Nb, C2, block_b*S2) with lanes (b, y2, x2): only a small batch de-interleave
    # reproduces torch's x.view(-1, 64*8*8) NCHW flatten.
    flat = jnp.transpose(y.reshape(Nb, C2, block_b, S2), (0, 2, 1, 3))
    flat = flat.reshape(Np, C2 * S2)

    out = fc_head(flat, params["fc1_w"], params["fc1_b"],
                  params["fc2_w"], params["fc2_b"])
    return out[:N]


def init_params(key):
    ks = jax.random.split(key, 8)
    return {
        # conv weights in HWIO (torch keeps OIHW; synthetic init, layouts noted)
        "conv1_w": jax.random.normal(ks[0], (3, 3, 3, 32), jnp.float32) * 0.1,
        "conv1_b": jax.random.normal(ks[1], (32,), jnp.float32) * 0.1,
        "conv2_w": jax.random.normal(ks[2], (3, 3, 32, 64), jnp.float32) * 0.05,
        "conv2_b": jax.random.normal(ks[3], (64,), jnp.float32) * 0.05,
        # fc weights stored as (in, out) == torch weight.T
        "fc1_w": jax.random.normal(ks[4], (64 * 8 * 8, 500), jnp.float32) * 0.02,
        "fc1_b": jax.random.normal(ks[5], (500,), jnp.float32) * 0.02,
        "fc2_w": jax.random.normal(ks[6], (500, 10), jnp.float32) * 0.05,
        "fc2_b": jax.random.normal(ks[7], (10,), jnp.float32) * 0.05,
    }


def reference_forward(x_nchw, p):
    """Plain-JAX reference with the same bf16 operand quantization as the kernels."""
    bf = jnp.bfloat16
    x = jnp.transpose(x_nchw, (0, 2, 3, 1)).astype(bf)

    def block(x, w, b):
        y = jax.lax.conv_general_dilated(
            x, w.astype(bf), window_strides=(1, 1), padding=((1, 1), (1, 1)),
            dimension_numbers=("NHWC", "HWIO", "NHWC"),
            preferred_element_type=jnp.float32)
        y = jnp.maximum(y + b, 0.0)
        y = jax.lax.reduce_window(y, -jnp.inf, jax.lax.max,
                                  (1, 2, 2, 1), (1, 2, 2, 1), "VALID")
        return y.astype(bf)

    y = block(x, p["conv1_w"], p["conv1_b"])
    y = block(y, p["conv2_w"], p["conv2_b"])
    flat = jnp.transpose(y, (0, 3, 1, 2)).reshape(x.shape[0], -1)
    h = jnp.dot(flat, p["fc1_w"].astype(bf),
                preferred_element_type=jnp.float32) + p["fc1_b"]
    h = jnp.maximum(h, 0.0).astype(bf)
    return jnp.dot(h, p["fc2_w"].astype(bf),
                   preferred_element_type=jnp.float32) + p["fc2_b"]


if __name__ == "__main__":
    key = jax.random.PRNGKey(0)
    pkey, xkey = jax.random.split(key)
    params = init_params(pkey)
    # CIFAR-shaped input (batch=2 kept small; 3x32x32 is forced by fc1 = 64*8*8)
    x = jax.random.normal(xkey, (2, 3, 32, 32), jnp.float32)

    _roll_matches_jnp()   # warm the roll-direction probe before tracing

    out = jax.block_until_ready(jax.jit(cifarnet_forward)(x, params))
    assert out.shape == (2, 10), out.shape

    ref = jax.block_until_ready(reference_forward(x, params))
    err = float(jnp.max(jnp.abs(out - ref.astype(jnp.float32))))
    assert err < 3e-3, f"mismatch vs reference: max abs err = {err}"

    print("KERNEL_OK")
</pallas_src>

<mosaic_0001>
module attributes {stable_mosaic.version = 11 : i64} {
  func.func @k(%arg0: memref<1x128xi32, #tpu.memory_space<vmem>>, %arg1: memref<1x128xi32, #tpu.memory_space<vmem>>) attributes {dimension_semantics = [], scalar_prefetch = 0 : i64, scratch_operands = 0 : i64, tpu.core_type = #tpu.core_type<tc>} {
    %c0 = arith.constant 0 : index
    %c0_0 = arith.constant 0 : index
    %0 = vector.load %arg0[%c0, %c0_0] : memref<1x128xi32, #tpu.memory_space<vmem>>, vector<1x128xi32>
    %c1_i32 = arith.constant 1 : i32
    %1 = tpu.dynamic_rotate %0 by %c1_i32 dim 1 : vector<1x128xi32>, i32 -> vector<1x128xi32>
    %c0_1 = arith.constant 0 : index
    %c0_2 = arith.constant 0 : index
    %2 = vector.load %arg1[%c0_1, %c0_2] : memref<1x128xi32, #tpu.memory_space<vmem>>, vector<1x128xi32>
    tpu.vector_store %arg1[%c0_1, %c0_2], %1 {strides = array<i32>} : memref<1x128xi32, #tpu.memory_space<vmem>>, vector<1x128xi32>,
    return
  }
}

</mosaic_0001>

<llo_original>
// kernel: tpu_custom_call.1
$region0: #{tpu_custom_call.1}
  #allocation0 [shape = 'u32[]', space=smem, size = 0x4, offset = 0x4, fixed_abs, tag = 'smem constant byte address 0x4 - core index']
  #allocation1 [shape = 'u32[144,128]{1,0:T(1,128)}', space=vmem, size = 0x12000, scoped, tag = 'internal scratch']
  %s0 = inlined_call_operand.hbm [shape: s32[1,128], index: 0, kind: input, shape index: {}]
  %s1 = inlined_call_operand.hbm [shape: s32[1,128], index: 1, kind: output, shape index: {}]
  %s2 = sld [smem:[#allocation0]]
  $region18: #{tpu_custom_call.1} parent=0
    _
  %s4 = ssub.s32 1, %s2
  %s5 = scalar_select 0, %s4, %s2
  $region1: #{tpu_custom_call.1} parent=0
    #allocation2 [shape = 'u8[512]{0}', space=vmem, size = 0x400, scoped, tag = 'input window, operand 0, single buffered']
    #allocation3 [shape = 's32[1]{0}', space=sflag, size = 0x4, scoped, tag = 'scoped memory for tpu_custom_call.1']
    #allocation4 [shape = 's32[1]{0}', space=sflag, size = 0x4, scoped, tag = 'scoped memory for tpu_custom_call.1']
    #allocation5 [shape = 'u8[512]{0}', space=vmem, size = 0x400, scoped, tag = 'output window, operand 0, single buffered']
    %6 = vsyncpa [#allocation3], 0
    %7 = vsyncpa [#allocation4], 0
    // Predicated region
    $region2: #{tpu_custom_call.1} parent=1 // pred_check
      _
    $region3: #{tpu_custom_call.1} parent=1 // pred_check_branch
      %9 = sbr.rel (0) target = $region5
    $region4: #{tpu_custom_call.1} parent=1 // pred_region
      %s11 = ssub.s32 16, 16
      %12 = vsyncadd [#allocation3], %s11
      %s14 = sshll.u32 [#allocation2], 4
      %s15 = int_to_ptr.vmem [resolvable:$true] %s14
      %17 = dma.hbm_to_vmem [thread:$0]  %s0, 16, %s15, [#allocation3]
    $region5: #{tpu_custom_call.1} parent=1 // pred_fallthru
      _
    // Predicated region
    $region6: #{tpu_custom_call.1} parent=1 // pred_check
      _
    $region7: #{tpu_custom_call.1} parent=1 // pred_check_branch
      %19 = sbr.rel (0) target = $region9
    $region8: #{tpu_custom_call.1} parent=1 // pred_region
      %20 = dma.done [#allocation3], 16
    $region9: #{tpu_custom_call.1} parent=1 // pred_fallthru
      _
    %v21 = vld [vmem:[#allocation2] sm:$0x1]
    %22 = vrot.lane.b32.xlu0 %v21, 1
    %v23 = vpop.permute.xlu0 %22
    %24 = vst [vmem:[#allocation5] sm:$0x1] %v23
    // Predicated region
    $region10: #{tpu_custom_call.1} parent=1 // pred_check
      _
    $region11: #{tpu_custom_call.1} parent=1 // pred_check_branch
      %26 = sbr.rel (0) target = $region13
    $region12: #{tpu_custom_call.1} parent=1 // pred_region
      %s28 = ssub.s32 16, 16
      %29 = vsyncadd [#allocation4], %s28
      %s31 = sshll.u32 [#allocation5], 4
      %s32 = int_to_ptr.vmem [resolvable:$true] %s31
      %34 = dma.vmem_to_hbm [thread:$0]  %s32, 16, %s1, [#allocation4]
    $region13: #{tpu_custom_call.1} parent=1 // pred_fallthru
      _
    // Predicated region
    $region14: #{tpu_custom_call.1} parent=1 // pred_check
      _
    $region15: #{tpu_custom_call.1} parent=1 // pred_check_branch
      %36 = sbr.rel (0) target = $region17
    $region16: #{tpu_custom_call.1} parent=1 // pred_region
      %37 = dma.done [#allocation4], 16
    $region17: #{tpu_custom_call.1} parent=1 // pred_fallthru
      _
    %38 = vsyncpa [#allocation3], 1
    %39 = vsyncpa [#allocation4], 1

</llo_original>
